<compile_context>
chip_gen: v5e
topology: v5e:2x2
jax: 0.10.0
libtpu: 0.0.40
codegen_flags: <defaults>
</compile_context>

<pallas_src>
import jax
import jax.numpy as jnp
from jax.experimental import pallas as pl
from jax.experimental.pallas import tpu as pltpu


def _aln_kernel(x_ref, s1_ref, b_ref, o_ref):
    # x_ref:  (1, C, T)            s1_ref: (1, C, 1)  (already 1 + scale)
    # b_ref:  (1, C, 1)            o_ref:  (1, C, T)
    x = x_ref[...].astype(jnp.float32)
    c = x.shape[1]
    inv_c = jnp.float32(1.0 / c)

    # Single-pass statistics over the channel axis (torch dim=1, unbiased=False).
    s1 = jnp.sum(x, axis=1, keepdims=True)                     # (1, 1, T)
    s2 = jnp.sum(x * x, axis=1, keepdims=True)                 # (1, 1, T)
    mean = s1 * inv_c
    var = jnp.maximum(s2 * inv_c - mean * mean, 0.0)

    # eps added OUTSIDE the sqrt to match the PyTorch module.
    # approx=False kept for the 1e-4 tolerance; op is only (1, 1, T) per block.
    inv = pl.reciprocal(jnp.sqrt(var) + 1e-5, approx=False)

    scale1 = s1_ref[...].astype(jnp.float32)                   # (1, C, 1)
    bias = b_ref[...].astype(jnp.float32)                      # (1, C, 1)

    # TODO(synk): for bf16 inputs on v6e/v7x the final apply could stay in bf16
    # (bf16 VALU); kept in f32 here for exactness across all generations.
    o_ref[...] = ((x - mean) * inv * scale1 + bias).astype(o_ref.dtype)


def _vmem_budget_bytes():
    """Generation-aware scoped-VMEM limit."""
    cap = None
    try:
        cap = getattr(pltpu.get_tpu_info(), "vmem_capacity_bytes", None)
    except Exception:
        cap = None
    if cap is None:
        cap = 128 * 1024 * 1024
    if cap <= 64 * 1024 * 1024:
        # v7x-class: 64 MiB per TensorCore; leave headroom for temps/spills.
        return 48 * 1024 * 1024
    # v5e / v6e: 128 MiB physical.
    return 96 * 1024 * 1024


def _largest_tile(hw_pad, cap_elems):
    """Largest multiple-of-128 divisor of hw_pad (itself a 128-multiple) <= cap."""
    cap = max(128, min(hw_pad, (cap_elems // 128) * 128))
    t = cap
    while hw_pad % t != 0:
        t -= 128
    return t


def adaptive_layer_norm(x, c, w_fc, b_fc):
    """x: (B, C, H, W), c: (B, c_dim), w_fc: (c_dim, 2C), b_fc: (2C,)."""
    B, C, H, W = x.shape
    HW = H * W

    # --- Hoisted conditioning path: SiLU -> Linear as one small XLA matmul.
    cf = c.astype(jnp.float32)
    h = cf * jax.nn.sigmoid(cf)                                          # SiLU
    sb = jnp.dot(h, w_fc.astype(jnp.float32),
                 preferred_element_type=jnp.float32) + b_fc.astype(jnp.float32)
    scale1 = (1.0 + sb[:, :C]).reshape(B, C, 1)   # (B, C, 1): C on sublanes
    bias = sb[:, C:].reshape(B, C, 1)             # (B, C, 1)

    # --- Pad HW to a multiple of 128 (lane-dense blocks; slice back after).
    HW_pad = ((HW + 127) // 128) * 128
    x_flat = x.reshape(B, C, HW)
    if HW_pad != HW:
        x_flat = jnp.pad(x_flat, ((0, 0), (0, 0), (0, HW_pad - HW)))

    itemsize = jnp.dtype(x.dtype).itemsize
    vmem_limit = _vmem_budget_bytes()
    # Block target: double-buffered in + out (+ f32 temps) must fit the limit.
    target_block_bytes = min(8 * 1024 * 1024, vmem_limit // 8)
    cap_elems = max(128, target_block_bytes // max(1, C * itemsize))
    tile_hw = _largest_tile(HW_pad, cap_elems)

    # Megacore friendliness (v7x 2 TCs): ensure >= 2 grid steps when possible.
    if B * (HW_pad // tile_hw) < 2 and tile_hw > 128:
        tile_hw = _largest_tile(HW_pad, tile_hw // 2)

    grid = (B, HW_pad // tile_hw)

    cost = pl.CostEstimate(
        flops=8 * B * C * HW_pad,
        transcendentals=2 * B * HW_pad,                    # sqrt + reciprocal
        bytes_accessed=(2 * B * C * HW_pad * itemsize      # x in + out
                        + 2 * B * C * 4 * grid[1]),        # scale1/bias per step
    )

    out_flat = pl.pallas_call(
        _aln_kernel,
        out_shape=jax.ShapeDtypeStruct((B, C, HW_pad), x.dtype),
        grid_spec=pltpu.PrefetchScalarGridSpec(
            num_scalar_prefetch=0,
            grid=grid,
            in_specs=[
                pl.BlockSpec((1, C, tile_hw), lambda b, t: (b, 0, t)),
                pl.BlockSpec((1, C, 1), lambda b, t: (b, 0, 0)),
                pl.BlockSpec((1, C, 1), lambda b, t: (b, 0, 0)),
            ],
            out_specs=pl.BlockSpec((1, C, tile_hw), lambda b, t: (b, 0, t)),
        ),
        compiler_params=pltpu.CompilerParams(
            dimension_semantics=("parallel", "parallel"),
            vmem_limit_bytes=vmem_limit,
        ),
        cost_estimate=cost,
    )(x_flat, scale1, bias)

    if HW_pad != HW:
        out_flat = out_flat[:, :, :HW]
    return out_flat.reshape(B, C, H, W)


def _reference(x, c, w_fc, b_fc):
    """Pure-JAX reference mirroring the PyTorch forward."""
    beta = jnp.mean(x, axis=1, keepdims=True)
    alpha = jnp.sqrt(jnp.var(x, axis=1, keepdims=True))  # unbiased=False
    xn = (x - beta) / (alpha + 1e-5)
    h = c * jax.nn.sigmoid(c)
    sb = h @ w_fc + b_fc
    C = x.shape[1]
    scale = sb[:, :C][:, :, None, None]
    bias = sb[:, C:][:, :, None, None]
    return xn * (1.0 + scale) + bias


if __name__ == "__main__":
    B, C, H, W = 2, 4, 16, 16
    c_dim = 8

    key = jax.random.PRNGKey(0)
    kx, kc, kw, kb = jax.random.split(key, 4)

    x = jax.random.normal(kx, (B, C, H, W), dtype=jnp.float32)
    cond = jax.random.normal(kc, (B, c_dim), dtype=jnp.float32)
    # nn.Linear(c_dim, 2*C): weight (2C, c_dim), bias (2C,). Stored transposed.
    w_fc = (jax.random.normal(kw, (c_dim, 2 * C), dtype=jnp.float32)
            * (1.0 / jnp.sqrt(c_dim)))
    b_fc = jax.random.normal(kb, (2 * C,), dtype=jnp.float32) * 0.1

    out = adaptive_layer_norm(x, cond, w_fc, b_fc)
    out = jax.block_until_ready(out)

    ref = _reference(x, cond, w_fc, b_fc)
    assert out.shape == (B, C, H, W)
    assert jnp.allclose(out, ref, atol=1e-4, rtol=1e-4), "mismatch vs reference"

    print("KERNEL_OK")
</pallas_src>

<mosaic_0001>
module attributes {stable_mosaic.version = 11 : i64} {
  func.func @_aln_kernel(%arg0: i32, %arg1: i32, %arg2: memref<1x4x256xf32, #tpu.memory_space<vmem>>, %arg3: memref<1x4x1xf32, #tpu.memory_space<vmem>>, %arg4: memref<1x4x1xf32, #tpu.memory_space<vmem>>, %arg5: memref<1x4x256xf32, #tpu.memory_space<vmem>>) attributes {dimension_semantics = [#tpu.dimension_semantics<parallel>, #tpu.dimension_semantics<parallel>], iteration_bounds = array<i64: 2, 1>, scalar_prefetch = 0 : i64, scratch_operands = 0 : i64, tpu.core_type = #tpu.core_type<tc>, window_params = [{transform_indices = @transform_0, window_bounds = array<i64: 1, 4, 256>}, {transform_indices = @transform_1, window_bounds = array<i64: 1, 4, 1>}, {transform_indices = @transform_2, window_bounds = array<i64: 1, 4, 1>}, {transform_indices = @transform_3, window_bounds = array<i64: 1, 4, 256>}]} {
    %c0 = arith.constant 0 : index
    %c0_0 = arith.constant 0 : index
    %c0_1 = arith.constant 0 : index
    %0 = vector.load %arg2[%c0, %c0_0, %c0_1] : memref<1x4x256xf32, #tpu.memory_space<vmem>>, vector<1x4x256xf32>
    %cst = arith.constant dense<0.000000e+00> : vector<1x256xf32>
    %1 = vector.multi_reduction <add>, %0, %cst [1] : vector<1x4x256xf32> to vector<1x256xf32>
    %2 = vector.shape_cast %1 : vector<1x256xf32> to vector<1x1x256xf32>
    %3 = arith.mulf %0, %0 : vector<1x4x256xf32>
    %cst_2 = arith.constant dense<0.000000e+00> : vector<1x256xf32>
    %4 = vector.multi_reduction <add>, %3, %cst_2 [1] : vector<1x4x256xf32> to vector<1x256xf32>
    %5 = vector.shape_cast %4 : vector<1x256xf32> to vector<1x1x256xf32>
    %cst_3 = arith.constant 2.500000e-01 : f32
    %6 = vector.broadcast %cst_3 : f32 to vector<1x1x256xf32>
    %7 = arith.mulf %2, %6 : vector<1x1x256xf32>
    %cst_4 = arith.constant 2.500000e-01 : f32
    %8 = vector.broadcast %cst_4 : f32 to vector<1x1x256xf32>
    %9 = arith.mulf %5, %8 : vector<1x1x256xf32>
    %10 = arith.mulf %7, %7 : vector<1x1x256xf32>
    %11 = arith.subf %9, %10 : vector<1x1x256xf32>
    %cst_5 = arith.constant 0.000000e+00 : f32
    %12 = vector.broadcast %cst_5 : f32 to vector<1x1x256xf32>
    %13 = arith.maximumf %11, %12 : vector<1x1x256xf32>
    %14 = math.sqrt %13 : vector<1x1x256xf32>
    %cst_6 = arith.constant 9.99999974E-6 : f32
    %15 = vector.broadcast %cst_6 : f32 to vector<1x1x256xf32>
    %16 = arith.addf %14, %15 : vector<1x1x256xf32>
    %17 = tpu.reciprocal %16 : vector<1x1x256xf32> -> vector<1x1x256xf32>
    %c0_7 = arith.constant 0 : index
    %c0_8 = arith.constant 0 : index
    %c0_9 = arith.constant 0 : index
    %18 = vector.load %arg3[%c0_7, %c0_8, %c0_9] : memref<1x4x1xf32, #tpu.memory_space<vmem>>, vector<1x4x1xf32>
    %c0_10 = arith.constant 0 : index
    %c0_11 = arith.constant 0 : index
    %c0_12 = arith.constant 0 : index
    %19 = vector.load %arg4[%c0_10, %c0_11, %c0_12] : memref<1x4x1xf32, #tpu.memory_space<vmem>>, vector<1x4x1xf32>
    %20 = vector.broadcast %7 : vector<1x1x256xf32> to vector<1x4x256xf32>
    %21 = arith.subf %0, %20 : vector<1x4x256xf32>
    %22 = vector.broadcast %17 : vector<1x1x256xf32> to vector<1x4x256xf32>
    %23 = arith.mulf %21, %22 : vector<1x4x256xf32>
    %24 = vector.broadcast %18 : vector<1x4x1xf32> to vector<1x4x256xf32>
    %25 = arith.mulf %23, %24 : vector<1x4x256xf32>
    %26 = vector.broadcast %19 : vector<1x4x1xf32> to vector<1x4x256xf32>
    %27 = arith.addf %25, %26 : vector<1x4x256xf32>
    %c0_13 = arith.constant 0 : index
    %c0_14 = arith.constant 0 : index
    %c0_15 = arith.constant 0 : index
    %28 = vector.load %arg5[%c0_13, %c0_14, %c0_15] : memref<1x4x256xf32, #tpu.memory_space<vmem>>, vector<1x4x256xf32>
    tpu.vector_store %arg5[%c0_13, %c0_14, %c0_15], %27 {strides = array<i32>} : memref<1x4x256xf32, #tpu.memory_space<vmem>>, vector<1x4x256xf32>,
    return
  }
  func.func @transform_0(%arg0: i32, %arg1: i32) -> (i32, i32, i32) {
    %c0_i32 = arith.constant 0 : i32
    %c0_i32_0 = arith.constant 0 : i32
    return %arg0, %c0_i32, %arg1 : i32, i32, i32
  }
  func.func @transform_1(%arg0: i32, %arg1: i32) -> (i32, i32, i32) {
    %c0_i32 = arith.constant 0 : i32
    %c0_i32_0 = arith.constant 0 : i32
    %c0_i32_1 = arith.constant 0 : i32
    return %arg0, %c0_i32, %c0_i32_0 : i32, i32, i32
  }
  func.func @transform_2(%arg0: i32, %arg1: i32) -> (i32, i32, i32) {
    %c0_i32 = arith.constant 0 : i32
    %c0_i32_0 = arith.constant 0 : i32
    %c0_i32_1 = arith.constant 0 : i32
    return %arg0, %c0_i32, %c0_i32_0 : i32, i32, i32
  }
  func.func @transform_3(%arg0: i32, %arg1: i32) -> (i32, i32, i32) {
    %c0_i32 = arith.constant 0 : i32
    %c0_i32_0 = arith.constant 0 : i32
    return %arg0, %c0_i32, %arg1 : i32, i32, i32
  }
}

</mosaic_0001>

<llo_original>
// kernel: tpu_custom_call.1
$region0: #{tpu_custom_call.1}
  #allocation0 [shape = 'u32[]', space=smem, size = 0x4, offset = 0x4, fixed_abs, tag = 'smem constant byte address 0x4 - core index']
  #allocation1 [shape = 'u32[72,128]{1,0:T(1,128)}', space=vmem, size = 0x9000, scoped, tag = 'internal scratch']
  %s0 = inlined_call_operand.vmem [shape: f32[2,4,256], index: 0, kind: input, shape index: {}]
  %s1 = inlined_call_operand.vmem [shape: f32[2,4,1], index: 1, kind: input, shape index: {}]
  %s2 = inlined_call_operand.vmem [shape: f32[2,4,1], index: 2, kind: input, shape index: {}]
  %s3 = inlined_call_operand.hbm [shape: f32[2,4,256], index: 3, kind: output, shape index: {}]
  %s4 = sld [smem:[#allocation0]]
  $region45: #{tpu_custom_call.1} parent=0
    _
  %s6 = ssub.s32 1, %s4
  %s7 = scalar_select 0, %s6, %s4
  $region1: #{tpu_custom_call.1} parent=0
    #allocation2 [shape = 'u8[8192]{0}', space=vmem, size = 0x2000, scoped, tag = 'output window, operand 0']
    #allocation3 [shape = 's32[2]{0}', space=sflag, size = 0x8, scoped, tag = 'scoped memory for tpu_custom_call.1']
    %8 = vsyncpa [#allocation3], 0
    %s9 = scalar_lea.sflag [#allocation3], 1
    %10 = vsyncpa %s9, 0
    loop: start=0, step=1, limit=4
    $region2: #{tpu_custom_call.1} parent=1 // loop_pre_header
      _
    $region3: #{tpu_custom_call.1} parent=1 // loop_header
      %s12 = sphi 0, %s16
      %p13 = scmp.ge.s32.totalorder %s12, 4
      %s19 = sphi 0, %s31
      %s20 = sphi 0, %s27
      %s21 = sphi 0, %s19
      %s22 = sphi 0, %s20
      %s23 = sphi 0, %s21
      %s24 = sphi 0, %s22
      %s36 = sphi 0, %s38
      %s39 = sphi 0, %s36
      %s40 = sphi 0, %s39
      %s56 = sphi 0, %s40
      %s62 = sphi 0, %s64
      %s65 = sphi 0, %s62
      %s66 = sphi 0, %s65
      %s82 = sphi 0, %s66
      %s88 = sphi 0, %s90
      %s91 = sphi 0, %s88
      %s92 = sphi 0, %s91
      %s108 = sphi 0, %s92
      %s116 = sphi 0, %s118
      %s119 = sphi 0, %s116
      %s120 = sphi 0, %s119
      %s136 = sphi 0, %s120
    $region4: #{tpu_custom_call.1} parent=1 // loop_header_branch
      %15 = sbr.rel (%p13) target = $region8
    $region5: #{tpu_custom_call.1} parent=1 // loop_body
      %s17 = ssub.s32 %s12, 1
      %s18 = ssub.s32 %s12, 2
      %s25 = sadd.s32 1, %s20
      %p26 = scmp.ge.s32.totalorder %s25, 1
      %s27 = scalar_select %p26, 0, %s25
      %s28 = sadd.s32 1, %s19
      %s29 = scalar_select %p26, %s28, %s19
      %p30 = scmp.ge.s32.totalorder %s29, 2
      %s31 = scalar_select %p30, 0, %s29
      %s32 = ssub.s32 %s19, %s31
      %s33 = ssub.s32 %s20, %s27
      %s34 = sor.u32 %s32, %s33
      %p35 = scmp.eq.s32.totalorder %s34, 0
      %s37 = sadd.s32 %s36, 1
      %s38 = scalar_select %p35, %s36, %s37
      %p41 = pneg %p35
      %p42 = scmp.eq.s32.totalorder %s12, 1
      %p43 = por %p41, %p42
      %p44 = scmp.ne.s32.totalorder %s36, %s39
      %p45 = scmp.eq.s32.totalorder %s12, 0
      %p46 = por %p44, %p45
      %p47 = scmp.ne.s32.totalorder %s36, %s39
      %p48 = scmp.eq.s32.totalorder %s17, 1
      %p49 = por %p47, %p48
      %p50 = scmp.ne.s32.totalorder %s39, %s40
      %p51 = scmp.eq.s32.totalorder %s17, 0
      %p52 = por %p50, %p51
      %p53 = scmp.ne.s32.totalorder %s39, %s40
      %p54 = scmp.eq.s32.totalorder %s18, 1
      %p55 = por %p53, %p54
      %p57 = scmp.ne.s32.totalorder %s40, %s56
      %p58 = scmp.eq.s32.totalorder %s18, 0
      %p59 = por %p57, %p58
      %s60 = ssub.s32 %s19, %s31
      %p61 = scmp.eq.s32.totalorder %s60, 0
      %s63 = sadd.s32 %s62, 1
      %s64 = scalar_select %p61, %s62, %s63
      %p67 = pneg %p61
      %p68 = scmp.eq.s32.totalorder %s12, 1
      %p69 = por %p67, %p68
      %p70 = scmp.ne.s32.totalorder %s62, %s65
      %p71 = scmp.eq.s32.totalorder %s12, 0
      %p72 = por %p70, %p71
      %p73 = scmp.ne.s32.totalorder %s62, %s65
      %p74 = scmp.eq.s32.totalorder %s17, 1
      %p75 = por %p73, %p74
      %p76 = scmp.ne.s32.totalorder %s65, %s66
      %p77 = scmp.eq.s32.totalorder %s17, 0
      %p78 = por %p76, %p77
      %p79 = scmp.ne.s32.totalorder %s65, %s66
      %p80 = scmp.eq.s32.totalorder %s18, 1
      %p81 = por %p79, %p80
      %p83 = scmp.ne.s32.totalorder %s66, %s82
      %p84 = scmp.eq.s32.totalorder %s18, 0
      %p85 = por %p83, %p84
      %s86 = ssub.s32 %s19, %s31
      %p87 = scmp.eq.s32.totalorder %s86, 0
      %s89 = sadd.s32 %s88, 1
      %s90 = scalar_select %p87, %s88, %s89
      %p93 = pneg %p87
      %p94 = scmp.eq.s32.totalorder %s12, 1
      %p95 = por %p93, %p94
      %p96 = scmp.ne.s32.totalorder %s88, %s91
      %p97 = scmp.eq.s32.totalorder %s12, 0
      %p98 = por %p96, %p97
      %p99 = scmp.ne.s32.totalorder %s88, %s91
      %p100 = scmp.eq.s32.totalorder %s17, 1
      %p101 = por %p99, %p100
      %p102 = scmp.ne.s32.totalorder %s91, %s92
      %p103 = scmp.eq.s32.totalorder %s17, 0
      %p104 = por %p102, %p103
      %p105 = scmp.ne.s32.totalorder %s91, %s92
      %p106 = scmp.eq.s32.totalorder %s18, 1
      %p107 = por %p105, %p106
      %p109 = scmp.ne.s32.totalorder %s92, %s108
      %p110 = scmp.eq.s32.totalorder %s18, 0
      %p111 = por %p109, %p110
      %s112 = ssub.s32 %s19, %s31
      %s113 = ssub.s32 %s20, %s27
      %s114 = sor.u32 %s112, %s113
      %p115 = scmp.eq.s32.totalorder %s114, 0
      %s117 = sadd.s32 %s116, 1
      %s118 = scalar_select %p115, %s116, %s117
      %p121 = pneg %p115
      %p122 = scmp.eq.s32.totalorder %s12, 1
      %p123 = por %p121, %p122
      %p124 = scmp.ne.s32.totalorder %s116, %s119
      %p125 = scmp.eq.s32.totalorder %s12, 0
      %p126 = por %p124, %p125
      %p127 = scmp.ne.s32.totalorder %s116, %s119
      %p128 = scmp.eq.s32.totalorder %s17, 1
      %p129 = por %p127, %p128
      %p130 = scmp.ne.s32.totalorder %s119, %s120
      %p131 = scmp.eq.s32.totalorder %s17, 0
      %p132 = por %p130, %p131
      %p133 = scmp.ne.s32.totalorder %s119, %s120
      %p134 = scmp.eq.s32.totalorder %s18, 1
      %p135 = por %p133, %p134
      %p137 = scmp.ne.s32.totalorder %s120, %s136
      %p138 = scmp.eq.s32.totalorder %s18, 0
      %p139 = por %p137, %p138
      %p140 = scmp.le.s32.totalorder 1, %s12
      %p141 = scmp.lt.s32.totalorder %s12, 3
      %p142 = pnand %p140, %p141
      %p143 = pneg %p142
      // Predicated region
      $region9: #{tpu_custom_call.1} parent=5 // pred_check
        _
      $region10: #{tpu_custom_call.1} parent=5 // pred_check_branch
        %145 = sbr.rel (%p142) target = $region12
      $region11: #{tpu_custom_call.1} parent=5 // pred_region
        %s146 = ssub.s32 %s12, 1
      $region12: #{tpu_custom_call.1} parent=5 // pred_fallthru
        _
      %p147 = scmp.lt.s32.totalorder %s12, 2
      // Predicated region
      $region13: #{tpu_custom_call.1} parent=5 // pred_check
        %p148 = pneg %p147
      $region14: #{tpu_custom_call.1} parent=5 // pred_check_branch
        %150 = sbr.rel (%p148) target = $region16
      $region15: #{tpu_custom_call.1} parent=5 // pred_region
        // Predicated region
        $region17: #{tpu_custom_call.1} parent=15 // pred_check
          %p151 = pneg %p46
        $region18: #{tpu_custom_call.1} parent=15 // pred_check_branch
          %153 = sbr.rel (%p151) target = $region20
        $region19: #{tpu_custom_call.1} parent=15 // pred_region
          %s154 = smul.u32 2, %s20
          %p155 = scmp.lt.s32.totalorder %s19, 1
          %s156 = scalar_select %p155, %s19, 1
          %p157 = scmp.lt.s32.totalorder %s154, 1
          %s158 = scalar_select %p157, %s154, 1
          %s159 = smul.addr %s156, 2
          %s160 = sadd.s32 %s158, %s159
          %s161 = smul.addr %s160, 4
          %s162 = scalar_lea.vmem %s0, %s161
          %s163 = smul.u32 2, %s20
        $region20: #{tpu_custom_call.1} parent=15 // pred_fallthru
          _
        // Predicated region
        $region21: #{tpu_custom_call.1} parent=15 // pred_check
          %p164 = pneg %p72
        $region22: #{tpu_custom_call.1} parent=15 // pred_check_branch
          %166 = sbr.rel (%p164) target = $region24
        $region23: #{tpu_custom_call.1} parent=15 // pred_region
          %p167 = scmp.lt.s32.totalorder %s19, 1
          %s168 = scalar_select %p167, %s19, 1
          %s169 = smul.addr %s168, 4
          %s170 = scalar_lea.vmem %s1, %s169
        $region24: #{tpu_custom_call.1} parent=15 // pred_fallthru
          _
        // Predicated region
        $region25: #{tpu_custom_call.1} parent=15 // pred_check
          %p171 = pneg %p98
        $region26: #{tpu_custom_call.1} parent=15 // pred_check_branch
          %173 = sbr.rel (%p171) target = $region28
        $region27: #{tpu_custom_call.1} parent=15 // pred_region
          %p174 = scmp.lt.s32.totalorder %s19, 1
          %s175 = scalar_select %p174, %s19, 1
          %s176 = smul.addr %s175, 4
          %s177 = scalar_lea.vmem %s2, %s176
        $region28: #{tpu_custom_call.1} parent=15 // pred_fallthru
          _
      $region16: #{tpu_custom_call.1} parent=5 // pred_fallthru
        _
      %p178 = scmp.le.s32.totalorder 1, %s12
      %p179 = scmp.lt.s32.totalorder %s12, 3
      %p180 = pnand %p178, %p179
      %p181 = pneg %p180
      // Predicated region
      $region29: #{tpu_custom_call.1} parent=5 // pred_check
        _
      $region30: #{tpu_custom_call.1} parent=5 // pred_check_branch
        %183 = sbr.rel (%p180) target = $region32
      $region31: #{tpu_custom_call.1} parent=5 // pred_region
        %s184 = ssub.s32 %s12, 1
        %s185 = smul.u32 2, %s22
        %p186 = scmp.lt.s32.totalorder %s21, 1
        %s187 = scalar_select %p186, %s21, 1
        %p188 = scmp.lt.s32.totalorder %s185, 1
        %s189 = scalar_select %p188, %s185, 1
        %s190 = smul.addr %s187, 2
        %s191 = sadd.s32 %s189, %s190
        %s192 = smul.addr %s191, 4
        %s193 = scalar_lea.vmem %s0, %s192
        %p194 = pneg %p52
        %p195 = pneg %p49
        %p196 = scmp.lt.s32.totalorder %s21, 1
        %s197 = scalar_select %p196, %s21, 1
        %s198 = smul.addr %s197, 4
        %s199 = scalar_lea.vmem %s1, %s198
        %p200 = pneg %p78
        %p201 = pneg %p75
        %p202 = scmp.lt.s32.totalorder %s21, 1
        %s203 = scalar_select %p202, %s21, 1
        %s204 = smul.addr %s203, 4
        %s205 = scalar_lea.vmem %s2, %s204
        %p206 = pneg %p104
        %p207 = pneg %p101
        %p208 = pneg %p132
        %p209 = pneg %p129
        %s210 = sand.u32 %s119, 1
        %s211 = scalar_lea.sflag [#allocation3], %s210
        %s212 = sand.u32 %s119, 1
        %s213 = smul.addr %s212, 8
        %s214 = scalar_lea.vmem [#allocation2], %s213
        %s215 = smul.u32 2, %s22
        %p216 = scmp.lt.s32.totalorder %s21, 1
        %s217 = scalar_select %p216, %s21, 1
        %p218 = scmp.lt.s32.totalorder %s215, 1
        %s219 = scalar_select %p218, %s215, 1
        %s220 = smul.addr %s217, 2
        %s221 = sadd.s32 %s219, %s220
        %s222 = smul.addr %s221, 4
        %s223 = scalar_lea.vmem %s0, %s222
        %s224 = smul.u32 2, %s22
        %p225 = scmp.lt.s32.totalorder %s21, 1
        %s226 = scalar_select %p225, %s21, 1
        %s227 = smul.addr %s226, 4
        %s228 = scalar_lea.vmem %s1, %s227
        %p229 = scmp.lt.s32.totalorder %s21, 1
        %s230 = scalar_select %p229, %s21, 1
        %s231 = smul.addr %s230, 4
        %s232 = scalar_lea.vmem %s2, %s231
        %s233 = smul.u32 2, %s22
        %v234 = vld [vmem:[%s223] sm:$0xff]
        %236 = vst [vmem:[#allocation1] ss:$2 sm:$0xff] %v234
        %v237 = vld.sshfl [vmem:[#allocation1] sm:$0xff pattern:$0x75316420]
        %v238 = vld.sshfl [vmem:[#allocation1 + $0x8] sm:$0xff pattern:$0x75316420]
        %vm241 = vcmask 1043456
        %v242 = vsel %vm241, %v237, 0.0
        %v243 = vrot.slane %v242, 4
        %v244 = vadd.f32 %v242, %v243
        %v245 = vrot.slane %v244, 2
        %v246 = vadd.f32 %v244, %v245
        %v247 = vrot.slane %v246, 1
        %v248 = vadd.f32 %v246, %v247
        %v249 = vsel %vm241, %v238, 0.0
        %v250 = vrot.slane %v249, 4
        %v251 = vadd.f32 %v249, %v250
        %v252 = vrot.slane %v251, 2
        %v253 = vadd.f32 %v251, %v252
        %v254 = vrot.slane %v253, 1
        %v255 = vadd.f32 %v253, %v254
        %v256 = vmul.f32 %v234, %v234
        %258 = vst [vmem:[#allocation1] ss:$2 sm:$0xff] %v256
        %v259 = vld.sshfl [vmem:[#allocation1] sm:$0xff pattern:$0x75316420]
        %v260 = vld.sshfl [vmem:[#allocation1 + $0x8] sm:$0xff pattern:$0x75316420]
        %v263 = vsel %vm241, %v259, 0.0
        %v264 = vrot.slane %v263, 4
        %v265 = vadd.f32 %v263, %v264
        %v266 = vrot.slane %v265, 2
        %v267 = vadd.f32 %v265, %v266
        %v268 = vrot.slane %v267, 1
        %v269 = vadd.f32 %v267, %v268
        %v270 = vsel %vm241, %v260, 0.0
        %v271 = vrot.slane %v270, 4
        %v272 = vadd.f32 %v270, %v271
        %v273 = vrot.slane %v272, 2
        %v274 = vadd.f32 %v272, %v273
        %v275 = vrot.slane %v274, 1
        %v276 = vadd.f32 %v274, %v275
        %v277 = vmul.f32 %v248, 0.25
        %v278 = vmul.f32 %v255, 0.25
        %v279 = vmul.f32 %v269, 0.25
        %v280 = vmul.f32 %v276, 0.25
        %v281 = vmul.f32 %v277, %v277
        %v282 = vmul.f32 %v278, %v278
        %v283 = vsub.f32 %v279, %v281
        %v284 = vsub.f32 %v280, %v282
        %v285 = vmax.f32 %v283, 0.0
        %v286 = vmax.f32 %v284, 0.0
        %v287 = vrsqrt.pop %v285
        %v288 = vmul.f32 %v287, %v285
        %v289 = vmul.f32 %v288, %v287
        %v290 = vmul.f32 0.5, %v289
        %v291 = vsub.f32 1.5, %v290
        %v292 = vmul.f32 %v287, %v291
        %v293 = vmul.f32 %v285, %v292
        %vm294 = vcmp.eq.f32.partialorder %v285, inf
        %v295 = vsel %vm294, %v285, %v293
        %vm296 = vcmp.eq.f32.partialorder %v285, 0.0
        %v297 = vand.u32 %v285, 2147483648
        %v298 = vsel %vm296, %v297, %v295
        %v299 = vrsqrt.pop %v286
        %v300 = vmul.f32 %v299, %v286
        %v301 = vmul.f32 %v300, %v299
        %v302 = vmul.f32 0.5, %v301
        %v303 = vsub.f32 1.5, %v302
        %v304 = vmul.f32 %v299, %v303
        %v305 = vmul.f32 %v286, %v304
        %vm306 = vcmp.eq.f32.partialorder %v286, inf
        %v307 = vsel %vm306, %v286, %v305
        %vm308 = vcmp.eq.f32.partialorder %v286, 0.0
        %v309 = vand.u32 %v286, 2147483648
        %v310 = vsel %vm308, %v309, %v307
        %v311 = vadd.f32 %v298, 1e-05
        %v312 = vadd.f32 %v310, 1e-05
        %v313 = vrcp.pop %v311
        %v314 = vmul.f32 %v311, %v313
        %v315 = vsub.f32 1.0, %v314
        %v316 = vmul.f32 %v313, %v315
        %v317 = vadd.f32 %v313, %v316
        %vm318 = vweird.f32 %v311
        %vm319 = vweird.f32 %v313
        %vm320 = vmor %vm318, %vm319
        %v321 = vsel %vm320, %v313, %v317
        %v322 = vand.u32 2147483647, %v311
        %vm323 = vcmp.eq.f32.partialorder %v322, 8.507059e+37
        %v324 = vand.u32 %v311, 2147483648
        %v325 = vor.u32 1.1754944e-38, %v324
        %v326 = vsel %vm323, %v325, %v321
        %v327 = vrcp.pop %v312
        %v328 = vmul.f32 %v312, %v327
        %v329 = vsub.f32 1.0, %v328
        %v330 = vmul.f32 %v327, %v329
        %v331 = vadd.f32 %v327, %v330
        %vm332 = vweird.f32 %v312
        %vm333 = vweird.f32 %v327
        %vm334 = vmor %vm332, %vm333
        %v335 = vsel %vm334, %v327, %v331
        %v336 = vand.u32 2147483647, %v312
        %vm337 = vcmp.eq.f32.partialorder %v336, 8.507059e+37
        %v338 = vand.u32 %v312, 2147483648
        %v339 = vor.u32 1.1754944e-38, %v338
        %v340 = vsel %vm337, %v339, %v335
        %v341 = vld [vmem:[%s228] sm:$0xf]
        %v342 = vld [vmem:[%s232] sm:$0xf]
        %v345 = vrot.slane %v278, 4
        %v346 = vsel %vm241, %v277, %v345
        %v348 = vsub.f32 %v234, %v346
        %v351 = vrot.slane %v340, 4
        %v352 = vsel %vm241, %v326, %v351
        %v354 = vmul.f32 %v348, %v352
        %356 = vset.pattern.permute.xlu0 0
        %357 = vperm.xlu0 %356, %v341
        %v358 = vpop.permute.xlu0 %357
        %v360 = vunpack.c.l.s4 839922192
        %v361 = vunpack.c.0.s8 %v360
        %v362 = vperm.slane %v358, %v361
        %v364 = vmul.f32 %v354, %v362
        %366 = vset.pattern.permute.xlu0 0
        %367 = vperm.xlu0 %366, %v342
        %v368 = vpop.permute.xlu0 %367
        %v370 = vunpack.c.l.s4 839922192
        %v371 = vunpack.c.0.s8 %v370
        %v372 = vperm.slane %v368, %v371
        %v374 = vadd.f32 %v364, %v372
        %375 = vst [vmem:[%s214] sm:$0xff] %v374
        %s376 = sand.u32 %s119, 1
        %s377 = scalar_lea.sflag [#allocation3], %s376
        %s378 = sand.u32 %s119, 1
        %s379 = smul.addr %s378, 8
        %s380 = scalar_lea.vmem [#allocation2], %s379
        // Predicated region
        $region33: #{tpu_custom_call.1} parent=31 // pred_check
          %p381 = pneg %p129
        $region34: #{tpu_custom_call.1} parent=31 // pred_check_branch
          %383 = sbr.rel (%p381) target = $region36
        $region35: #{tpu_custom_call.1} parent=31 // pred_region
          %s384 = smul.u32 2, %s22
          %386 = vsyncadd %s377, 0
          %s387 = smul.addr %s21, 2
          %s388 = sadd.s32 %s384, %s387
          %s389 = smul.addr %s388, 4
          %s390 = scalar_lea.hbm %s3, %s389
          %s392 = sshll.u32 %s380, 4
          %s393 = int_to_ptr.vmem [resolvable:$true] %s392
          %s394 = sshll.u32 %s390, 4
          %s395 = int_to_ptr.hbm [resolvable:$true] %s394
          %397 = dma.vmem_to_hbm [thread:$0]  %s393, 128, %s395, %s377
        $region36: #{tpu_custom_call.1} parent=31 // pred_fallthru
          _
      $region32: #{tpu_custom_call.1} parent=5 // pred_fallthru
        _
      %p398 = scmp.le.s32.totalorder 2, %s12
      // Predicated region
      $region37: #{tpu_custom_call.1} parent=5 // pred_check
        %p399 = pneg %p398
      $region38: #{tpu_custom_call.1} parent=5 // pred_check_branch
        %401 = sbr.rel (%p399) target = $region40
      $region39: #{tpu_custom_call.1} parent=5 // pred_region
        %s402 = ssub.s32 %s12, 2
        // Predicated region
        $region41: #{tpu_custom_call.1} parent=39 // pred_check
          %p403 = pneg %p135
        $region42: #{tpu_custom_call.1} parent=39 // pred_check_branch
          %405 = sbr.rel (%p403) target = $region44
        $region43: #{tpu_custom_call.1} parent=39 // pred_region
          %s406 = sand.u32 %s120, 1
          %s407 = scalar_lea.sflag [#allocation3], %s406
          %s408 = sand.u32 %s120, 1
          %s409 = smul.addr %s408, 8
          %s410 = scalar_lea.vmem [#allocation2], %s409
          %412 = dma.done %s407, 128
        $region44: #{tpu_custom_call.1} parent=39 // pred_fallthru
          _
      $region40: #{tpu_custom_call.1} parent=5 // pred_fallthru
        _
    $region6: #{tpu_custom_call.1} parent=1 // loop_footer
      %s16 = sadd.s32 1, %s12
    $region7: #{tpu_custom_call.1} parent=1 // loop_footer_branch
      %11 = sbr.rel target = $region3
    $region8: #{tpu_custom_call.1} parent=1 // loop_exit
      _
    %413 = vsyncpa [#allocation3], 1
    %s414 = scalar_lea.sflag [#allocation3], 1
    %415 = vsyncpa %s414, 1

</llo_original>
